<compile_context>
chip_gen: v6e
topology: v6e:2x2x1
jax: 0.10.0
libtpu: 0.0.40
codegen_flags: <defaults>
</compile_context>

<pallas_src>
import functools

import jax
import jax.numpy as jnp
from jax import lax
from jax.experimental import pallas as pl
from jax.experimental.pallas import tpu as pltpu


def _gep_kernel(x_ref, pw_ref, dw_ref, rc_ref, o_ref, *, H, W, KH, KW, apply_relu):
    """Fused pointwise(1x1) + depthwise(KHxKW, stride 1) conv for one (batch, Cout-tile).

    x_ref : (1, Cin, H*W)       input image, flat spatial on lanes, native dtype
    pw_ref: (TCo, Cin)          pointwise weight tile
    dw_ref: (KH*KW, TCo, 1)     depthwise weight taps (per output channel)
    rc_ref: (2, H*W) int32      row ids / col ids of each flat pixel (border masks)
    o_ref : (1, TCo, H*W)
    """
    HW = H * W
    pad_h, pad_w = KH // 2, KW // 2

    # --- pointwise 1x1 conv: one MXU matmul, native dtype in, f32 accumulate ---
    p = jnp.dot(pw_ref[...], x_ref[0], preferred_element_type=jnp.float32)  # (TCo, HW)

    row = rc_ref[0:1, :]   # (1, HW) int32
    col = rc_ref[1:2, :]   # (1, HW) int32

    # --- depthwise KxK conv in flat lane space ---
    # Tap (kh, kw) reads pixel (h+kh-pad_h, w+kw-pad_w) == flat offset
    # s = (kh-pad_h)*W + (kw-pad_w).  A lane roll realizes the shift (XLU) and a
    # row/col mask realizes the implicit zero padding at the image border (any
    # wrapped / cross-row lanes fall only on masked positions).
    acc = jnp.zeros(p.shape, jnp.float32)
    for kh in range(KH):
        for kw in range(KW):
            dh = kh - pad_h
            dc = kw - pad_w
            s = dh * W + dc
            shifted = p if s == 0 else pltpu.roll(p, shift=(-s) % HW, axis=1)
            conds = []
            if dh < 0:
                conds.append(row >= -dh)
            if dh > 0:
                conds.append(row < H - dh)
            if dc < 0:
                conds.append(col >= -dc)
            if dc > 0:
                conds.append(col < W - dc)
            if conds:
                mask = conds[0]
                for cnd in conds[1:]:
                    mask = jnp.logical_and(mask, cnd)
                shifted = jnp.where(mask, shifted, 0.0)
            w_tap = dw_ref[kh * KW + kw].astype(jnp.float32)        # (TCo, 1)
            acc = acc + shifted * w_tap

    if apply_relu:
        acc = jnp.maximum(acc, 0.0)
    # TODO(synk): BatchNorm2d (bn=True) and the rank>1 branch of GEPdecompose are not
    # implemented (defaults bn=False, rank=1 are).
    o_ref[0] = acc.astype(o_ref.dtype)


def _pick_cout_tile(cout, max_tile=256):
    """Largest Cout tile <= max_tile that divides Cout and keeps (8,128)-legal blocks."""
    if cout <= max_tile:
        return cout
    for t in range(max_tile, 7, -1):
        if cout % t == 0 and t % 8 == 0:
            return t
    return cout


def gep_forward(x_nchw, pw_weight, dw_weight, relu=False):
    """GEPdecompose.forward (rank=1, stride=1, bn=False).

    x_nchw   : (N, Cin, H, W)
    pw_weight: (Cout, Cin, 1, 1)    PyTorch point_wise.weight layout
    dw_weight: (Cout, 1, KH, KW)    PyTorch depth_wise.weight layout
    returns  : (N, Cout, H, W)
    """
    N, Cin, H, W = x_nchw.shape
    Cout = pw_weight.shape[0]
    KH, KW = int(dw_weight.shape[2]), int(dw_weight.shape[3])
    assert KH % 2 == 1 and KW % 2 == 1, "odd depthwise kernel assumed (padding = K//2)"
    HW = H * W

    # Free layout plumbing only (contiguous reshapes / tiny weight reorders).
    x_flat = x_nchw.reshape(N, Cin, HW)
    pw_mat = pw_weight[:, :, 0, 0]                                        # (Cout, Cin)
    dw_taps = jnp.transpose(dw_weight[:, 0, :, :].reshape(Cout, KH * KW),
                            (1, 0))[:, :, None]                           # (KH*KW, Cout, 1)
    ids = jnp.arange(HW, dtype=jnp.int32)
    rc = jnp.stack([ids // W, ids % W], axis=0)                           # (2, HW)

    tco = _pick_cout_tile(Cout)
    ct = Cout // tco

    kernel = functools.partial(_gep_kernel, H=H, W=W, KH=KH, KW=KW, apply_relu=relu)

    itemsize = jnp.dtype(x_nchw.dtype).itemsize
    cost = pl.CostEstimate(
        flops=2 * N * HW * Cin * Cout + 2 * N * HW * Cout * KH * KW,
        transcendentals=0,
        bytes_accessed=(N * Cin * HW + Cout * Cin + Cout * KH * KW
                        + N * Cout * HW) * itemsize + 2 * HW * 4,
    )

    out_flat = pl.pallas_call(
        kernel,
        out_shape=jax.ShapeDtypeStruct((N, Cout, HW), x_nchw.dtype),
        grid_spec=pltpu.PrefetchScalarGridSpec(
            num_scalar_prefetch=0,
            grid=(N, ct),  # Cout tiles innermost -> x block stays VMEM-resident per n
            in_specs=[
                pl.BlockSpec((1, Cin, HW), lambda n, c: (n, 0, 0)),
                pl.BlockSpec((tco, Cin), lambda n, c: (c, 0)),
                pl.BlockSpec((KH * KW, tco, 1), lambda n, c: (0, c, 0)),
                pl.BlockSpec((2, HW), lambda n, c: (0, 0)),
            ],
            out_specs=pl.BlockSpec((1, tco, HW), lambda n, c: (n, c, 0)),
        ),
        compiler_params=pltpu.CompilerParams(
            dimension_semantics=("parallel", "parallel")),
        cost_estimate=cost,
    )(x_flat, pw_mat, dw_taps, rc)

    return out_flat.reshape(N, Cout, H, W)


def gep_reference(x_nchw, pw_weight, dw_weight, relu=False):
    """Pure-JAX reference matching the PyTorch semantics (f32-exact convs)."""
    pw_out = lax.conv_general_dilated(
        x_nchw, pw_weight, window_strides=(1, 1), padding="VALID",
        dimension_numbers=("NCHW", "OIHW", "NCHW"),
        precision=lax.Precision.HIGHEST)
    KH, KW = dw_weight.shape[2], dw_weight.shape[3]
    out = lax.conv_general_dilated(
        pw_out, dw_weight, window_strides=(1, 1),
        padding=[(KH // 2, KH // 2), (KW // 2, KW // 2)],
        dimension_numbers=("NCHW", "OIHW", "NCHW"),
        feature_group_count=dw_weight.shape[0],
        precision=lax.Precision.HIGHEST)
    if relu:
        out = jnp.maximum(out, 0.0)
    return out


if __name__ == "__main__":
    # Synthetic config implied by GEPdecompose(Conv2d(in=4, out=8, kernel=3, stride=1),
    # rank=1, alpha=1.0, bn=False, relu=False).
    N, Cin, Cout, H, W, K = 2, 4, 8, 16, 16, 3

    key = jax.random.PRNGKey(0)
    kx, kp, kd = jax.random.split(key, 3)
    x = jax.random.normal(kx, (N, Cin, H, W), dtype=jnp.float32)
    pw_weight = jax.random.normal(kp, (Cout, Cin, 1, 1), dtype=jnp.float32) * 0.1
    dw_weight = jax.random.normal(kd, (Cout, 1, K, K), dtype=jnp.float32) * 0.1

    out = jax.block_until_ready(gep_forward(x, pw_weight, dw_weight, relu=False))
    ref = jax.block_until_ready(gep_reference(x, pw_weight, dw_weight, relu=False))

    assert out.shape == (N, Cout, H, W), out.shape
    max_err = float(jnp.max(jnp.abs(out - ref)))
    assert jnp.allclose(out, ref, atol=1e-4, rtol=1e-4), max_err
    print("KERNEL_OK")
</pallas_src>

<mosaic_0001>
module attributes {stable_mosaic.version = 11 : i64} {
  func.func @_gep_kernel(%arg0: i32, %arg1: i32, %arg2: memref<1x4x256xf32, #tpu.memory_space<vmem>>, %arg3: memref<8x4xf32, #tpu.memory_space<vmem>>, %arg4: memref<9x8x1xf32, #tpu.memory_space<vmem>>, %arg5: memref<2x256xi32, #tpu.memory_space<vmem>>, %arg6: memref<1x8x256xf32, #tpu.memory_space<vmem>>) attributes {dimension_semantics = [#tpu.dimension_semantics<parallel>, #tpu.dimension_semantics<parallel>], iteration_bounds = array<i64: 2, 1>, scalar_prefetch = 0 : i64, scratch_operands = 0 : i64, tpu.core_type = #tpu.core_type<tc>, window_params = [{transform_indices = @transform_0, window_bounds = array<i64: 1, 4, 256>}, {transform_indices = @transform_1, window_bounds = array<i64: 8, 4>}, {transform_indices = @transform_2, window_bounds = array<i64: 9, 8, 1>}, {pipeline_mode = #tpu.pipeline_mode<synchronous>, transform_indices = @transform_3, window_bounds = array<i64: 2, 256>}, {transform_indices = @transform_4, window_bounds = array<i64: 1, 8, 256>}]} {
    %c0 = arith.constant 0 : index
    %c0_0 = arith.constant 0 : index
    %0 = vector.load %arg3[%c0, %c0_0] : memref<8x4xf32, #tpu.memory_space<vmem>>, vector<8x4xf32>
    %c0_1 = arith.constant 0 : index
    %c0_2 = arith.constant 0 : index
    %c0_3 = arith.constant 0 : index
    %1 = vector.load %arg2[%c0_1, %c0_2, %c0_3] : memref<1x4x256xf32, #tpu.memory_space<vmem>>, vector<1x4x256xf32>
    %2 = vector.shape_cast %1 : vector<1x4x256xf32> to vector<4x256xf32>
    %cst = arith.constant dense<0.000000e+00> : vector<8x256xf32>
    %3 = tpu.matmul %0, %2, %cst {dimension_numbers = #tpu.dot_dimension_numbers<[1], [0], [0], [1], [0, 0, 1, 1], [], []>} : vector<8x4xf32>, vector<4x256xf32>, vector<8x256xf32> -> vector<8x256xf32>
    %c0_4 = arith.constant 0 : index
    %c0_5 = arith.constant 0 : index
    %4 = vector.load %arg5[%c0_4, %c0_5] : memref<2x256xi32, #tpu.memory_space<vmem>>, vector<1x256xi32>
    %c1 = arith.constant 1 : index
    %c0_6 = arith.constant 0 : index
    %5 = vector.load %arg5[%c1, %c0_6] : memref<2x256xi32, #tpu.memory_space<vmem>>, vector<1x256xi32>
    %cst_7 = arith.constant 0.000000e+00 : f32
    %6 = vector.broadcast %cst_7 : f32 to vector<8x256xf32>
    %c17_i32 = arith.constant 17 : i32
    %7 = tpu.dynamic_rotate %3 by %c17_i32 dim 1 : vector<8x256xf32>, i32 -> vector<8x256xf32>
    %c1_i32 = arith.constant 1 : i32
    %8 = vector.broadcast %c1_i32 : i32 to vector<1x256xi32>
    %9 = arith.cmpi sge, %4, %8 : vector<1x256xi32>
    %c1_i32_8 = arith.constant 1 : i32
    %10 = vector.broadcast %c1_i32_8 : i32 to vector<1x256xi32>
    %11 = arith.cmpi sge, %5, %10 : vector<1x256xi32>
    %12 = arith.andi %9, %11 : vector<1x256xi1>
    %cst_9 = arith.constant 0.000000e+00 : f32
    %13 = vector.shape_cast %12 : vector<1x256xi1> to vector<1x256xi1>
    %14 = vector.broadcast %13 : vector<1x256xi1> to vector<8x256xi1>
    %15 = vector.broadcast %cst_9 : f32 to vector<8x256xf32>
    %16 = arith.select %14, %7, %15 : vector<8x256xi1>, vector<8x256xf32>
    %c0_10 = arith.constant 0 : index
    %c0_11 = arith.constant 0 : index
    %c0_12 = arith.constant 0 : index
    %17 = vector.load %arg4[%c0_10, %c0_11, %c0_12] : memref<9x8x1xf32, #tpu.memory_space<vmem>>, vector<1x8x1xf32>
    %18 = vector.shape_cast %17 : vector<1x8x1xf32> to vector<8x1xf32>
    %19 = vector.broadcast %18 : vector<8x1xf32> to vector<8x256xf32>
    %20 = arith.mulf %16, %19 : vector<8x256xf32>
    %21 = arith.addf %6, %20 : vector<8x256xf32>
    %c16_i32 = arith.constant 16 : i32
    %22 = tpu.dynamic_rotate %3 by %c16_i32 dim 1 : vector<8x256xf32>, i32 -> vector<8x256xf32>
    %c1_i32_13 = arith.constant 1 : i32
    %23 = vector.broadcast %c1_i32_13 : i32 to vector<1x256xi32>
    %24 = arith.cmpi sge, %4, %23 : vector<1x256xi32>
    %cst_14 = arith.constant 0.000000e+00 : f32
    %25 = vector.shape_cast %24 : vector<1x256xi1> to vector<1x256xi1>
    %26 = vector.broadcast %25 : vector<1x256xi1> to vector<8x256xi1>
    %27 = vector.broadcast %cst_14 : f32 to vector<8x256xf32>
    %28 = arith.select %26, %22, %27 : vector<8x256xi1>, vector<8x256xf32>
    %c1_15 = arith.constant 1 : index
    %c0_16 = arith.constant 0 : index
    %c0_17 = arith.constant 0 : index
    %29 = vector.load %arg4[%c1_15, %c0_16, %c0_17] : memref<9x8x1xf32, #tpu.memory_space<vmem>>, vector<1x8x1xf32>
    %30 = vector.shape_cast %29 : vector<1x8x1xf32> to vector<8x1xf32>
    %31 = vector.broadcast %30 : vector<8x1xf32> to vector<8x256xf32>
    %32 = arith.mulf %28, %31 : vector<8x256xf32>
    %33 = arith.addf %21, %32 : vector<8x256xf32>
    %c15_i32 = arith.constant 15 : i32
    %34 = tpu.dynamic_rotate %3 by %c15_i32 dim 1 : vector<8x256xf32>, i32 -> vector<8x256xf32>
    %c1_i32_18 = arith.constant 1 : i32
    %35 = vector.broadcast %c1_i32_18 : i32 to vector<1x256xi32>
    %36 = arith.cmpi sge, %4, %35 : vector<1x256xi32>
    %c15_i32_19 = arith.constant 15 : i32
    %37 = vector.broadcast %c15_i32_19 : i32 to vector<1x256xi32>
    %38 = arith.cmpi slt, %5, %37 : vector<1x256xi32>
    %39 = arith.andi %36, %38 : vector<1x256xi1>
    %cst_20 = arith.constant 0.000000e+00 : f32
    %40 = vector.shape_cast %39 : vector<1x256xi1> to vector<1x256xi1>
    %41 = vector.broadcast %40 : vector<1x256xi1> to vector<8x256xi1>
    %42 = vector.broadcast %cst_20 : f32 to vector<8x256xf32>
    %43 = arith.select %41, %34, %42 : vector<8x256xi1>, vector<8x256xf32>
    %c2 = arith.constant 2 : index
    %c0_21 = arith.constant 0 : index
    %c0_22 = arith.constant 0 : index
    %44 = vector.load %arg4[%c2, %c0_21, %c0_22] : memref<9x8x1xf32, #tpu.memory_space<vmem>>, vector<1x8x1xf32>
    %45 = vector.shape_cast %44 : vector<1x8x1xf32> to vector<8x1xf32>
    %46 = vector.broadcast %45 : vector<8x1xf32> to vector<8x256xf32>
    %47 = arith.mulf %43, %46 : vector<8x256xf32>
    %48 = arith.addf %33, %47 : vector<8x256xf32>
    %c1_i32_23 = arith.constant 1 : i32
    %49 = tpu.dynamic_rotate %3 by %c1_i32_23 dim 1 : vector<8x256xf32>, i32 -> vector<8x256xf32>
    %c1_i32_24 = arith.constant 1 : i32
    %50 = vector.broadcast %c1_i32_24 : i32 to vector<1x256xi32>
    %51 = arith.cmpi sge, %5, %50 : vector<1x256xi32>
    %cst_25 = arith.constant 0.000000e+00 : f32
    %52 = vector.shape_cast %51 : vector<1x256xi1> to vector<1x256xi1>
    %53 = vector.broadcast %52 : vector<1x256xi1> to vector<8x256xi1>
    %54 = vector.broadcast %cst_25 : f32 to vector<8x256xf32>
    %55 = arith.select %53, %49, %54 : vector<8x256xi1>, vector<8x256xf32>
    %c3 = arith.constant 3 : index
    %c0_26 = arith.constant 0 : index
    %c0_27 = arith.constant 0 : index
    %56 = vector.load %arg4[%c3, %c0_26, %c0_27] : memref<9x8x1xf32, #tpu.memory_space<vmem>>, vector<1x8x1xf32>
    %57 = vector.shape_cast %56 : vector<1x8x1xf32> to vector<8x1xf32>
    %58 = vector.broadcast %57 : vector<8x1xf32> to vector<8x256xf32>
    %59 = arith.mulf %55, %58 : vector<8x256xf32>
    %60 = arith.addf %48, %59 : vector<8x256xf32>
    %c4 = arith.constant 4 : index
    %c0_28 = arith.constant 0 : index
    %c0_29 = arith.constant 0 : index
    %61 = vector.load %arg4[%c4, %c0_28, %c0_29] : memref<9x8x1xf32, #tpu.memory_space<vmem>>, vector<1x8x1xf32>
    %62 = vector.shape_cast %61 : vector<1x8x1xf32> to vector<8x1xf32>
    %63 = vector.broadcast %62 : vector<8x1xf32> to vector<8x256xf32>
    %64 = arith.mulf %3, %63 : vector<8x256xf32>
    %65 = arith.addf %60, %64 : vector<8x256xf32>
    %c255_i32 = arith.constant 255 : i32
    %66 = tpu.dynamic_rotate %3 by %c255_i32 dim 1 : vector<8x256xf32>, i32 -> vector<8x256xf32>
    %c15_i32_30 = arith.constant 15 : i32
    %67 = vector.broadcast %c15_i32_30 : i32 to vector<1x256xi32>
    %68 = arith.cmpi slt, %5, %67 : vector<1x256xi32>
    %cst_31 = arith.constant 0.000000e+00 : f32
    %69 = vector.shape_cast %68 : vector<1x256xi1> to vector<1x256xi1>
    %70 = vector.broadcast %69 : vector<1x256xi1> to vector<8x256xi1>
    %71 = vector.broadcast %cst_31 : f32 to vector<8x256xf32>
    %72 = arith.select %70, %66, %71 : vector<8x256xi1>, vector<8x256xf32>
    %c5 = arith.constant 5 : index
    %c0_32 = arith.constant 0 : index
    %c0_33 = arith.constant 0 : index
    %73 = vector.load %arg4[%c5, %c0_32, %c0_33] : memref<9x8x1xf32, #tpu.memory_space<vmem>>, vector<1x8x1xf32>
    %74 = vector.shape_cast %73 : vector<1x8x1xf32> to vector<8x1xf32>
    %75 = vector.broadcast %74 : vector<8x1xf32> to vector<8x256xf32>
    %76 = arith.mulf %72, %75 : vector<8x256xf32>
    %77 = arith.addf %65, %76 : vector<8x256xf32>
    %c241_i32 = arith.constant 241 : i32
    %78 = tpu.dynamic_rotate %3 by %c241_i32 dim 1 : vector<8x256xf32>, i32 -> vector<8x256xf32>
    %c15_i32_34 = arith.constant 15 : i32
    %79 = vector.broadcast %c15_i32_34 : i32 to vector<1x256xi32>
    %80 = arith.cmpi slt, %4, %79 : vector<1x256xi32>
    %c1_i32_35 = arith.constant 1 : i32
    %81 = vector.broadcast %c1_i32_35 : i32 to vector<1x256xi32>
    %82 = arith.cmpi sge, %5, %81 : vector<1x256xi32>
    %83 = arith.andi %80, %82 : vector<1x256xi1>
    %cst_36 = arith.constant 0.000000e+00 : f32
    %84 = vector.shape_cast %83 : vector<1x256xi1> to vector<1x256xi1>
    %85 = vector.broadcast %84 : vector<1x256xi1> to vector<8x256xi1>
    %86 = vector.broadcast %cst_36 : f32 to vector<8x256xf32>
    %87 = arith.select %85, %78, %86 : vector<8x256xi1>, vector<8x256xf32>
    %c6 = arith.constant 6 : index
    %c0_37 = arith.constant 0 : index
    %c0_38 = arith.constant 0 : index
    %88 = vector.load %arg4[%c6, %c0_37, %c0_38] : memref<9x8x1xf32, #tpu.memory_space<vmem>>, vector<1x8x1xf32>
    %89 = vector.shape_cast %88 : vector<1x8x1xf32> to vector<8x1xf32>
    %90 = vector.broadcast %89 : vector<8x1xf32> to vector<8x256xf32>
    %91 = arith.mulf %87, %90 : vector<8x256xf32>
    %92 = arith.addf %77, %91 : vector<8x256xf32>
    %c240_i32 = arith.constant 240 : i32
    %93 = tpu.dynamic_rotate %3 by %c240_i32 dim 1 : vector<8x256xf32>, i32 -> vector<8x256xf32>
    %c15_i32_39 = arith.constant 15 : i32
    %94 = vector.broadcast %c15_i32_39 : i32 to vector<1x256xi32>
    %95 = arith.cmpi slt, %4, %94 : vector<1x256xi32>
    %cst_40 = arith.constant 0.000000e+00 : f32
    %96 = vector.shape_cast %95 : vector<1x256xi1> to vector<1x256xi1>
    %97 = vector.broadcast %96 : vector<1x256xi1> to vector<8x256xi1>
    %98 = vector.broadcast %cst_40 : f32 to vector<8x256xf32>
    %99 = arith.select %97, %93, %98 : vector<8x256xi1>, vector<8x256xf32>
    %c7 = arith.constant 7 : index
    %c0_41 = arith.constant 0 : index
    %c0_42 = arith.constant 0 : index
    %100 = vector.load %arg4[%c7, %c0_41, %c0_42] : memref<9x8x1xf32, #tpu.memory_space<vmem>>, vector<1x8x1xf32>
    %101 = vector.shape_cast %100 : vector<1x8x1xf32> to vector<8x1xf32>
    %102 = vector.broadcast %101 : vector<8x1xf32> to vector<8x256xf32>
    %103 = arith.mulf %99, %102 : vector<8x256xf32>
    %104 = arith.addf %92, %103 : vector<8x256xf32>
    %c239_i32 = arith.constant 239 : i32
    %105 = tpu.dynamic_rotate %3 by %c239_i32 dim 1 : vector<8x256xf32>, i32 -> vector<8x256xf32>
    %c15_i32_43 = arith.constant 15 : i32
    %106 = vector.broadcast %c15_i32_43 : i32 to vector<1x256xi32>
    %107 = arith.cmpi slt, %4, %106 : vector<1x256xi32>
    %c15_i32_44 = arith.constant 15 : i32
    %108 = vector.broadcast %c15_i32_44 : i32 to vector<1x256xi32>
    %109 = arith.cmpi slt, %5, %108 : vector<1x256xi32>
    %110 = arith.andi %107, %109 : vector<1x256xi1>
    %cst_45 = arith.constant 0.000000e+00 : f32
    %111 = vector.shape_cast %110 : vector<1x256xi1> to vector<1x256xi1>
    %112 = vector.broadcast %111 : vector<1x256xi1> to vector<8x256xi1>
    %113 = vector.broadcast %cst_45 : f32 to vector<8x256xf32>
    %114 = arith.select %112, %105, %113 : vector<8x256xi1>, vector<8x256xf32>
    %c8 = arith.constant 8 : index
    %c0_46 = arith.constant 0 : index
    %c0_47 = arith.constant 0 : index
    %115 = vector.load %arg4[%c8, %c0_46, %c0_47] : memref<9x8x1xf32, #tpu.memory_space<vmem>>, vector<1x8x1xf32>
    %116 = vector.shape_cast %115 : vector<1x8x1xf32> to vector<8x1xf32>
    %117 = vector.broadcast %116 : vector<8x1xf32> to vector<8x256xf32>
    %118 = arith.mulf %114, %117 : vector<8x256xf32>
    %119 = arith.addf %104, %118 : vector<8x256xf32>
    %c0_48 = arith.constant 0 : index
    %c0_49 = arith.constant 0 : index
    %c0_50 = arith.constant 0 : index
    %120 = vector.load %arg6[%c0_48, %c0_49, %c0_50] : memref<1x8x256xf32, #tpu.memory_space<vmem>>, vector<1x8x256xf32>
    %121 = vector.shape_cast %120 : vector<1x8x256xf32> to vector<8x256xf32>
    %122 = vector.shape_cast %119 : vector<8x256xf32> to vector<1x8x256xf32>
    tpu.vector_store %arg6[%c0_48, %c0_49, %c0_50], %122 {strides = array<i32>} : memref<1x8x256xf32, #tpu.memory_space<vmem>>, vector<1x8x256xf32>,
    return
  }
  func.func @transform_0(%arg0: i32, %arg1: i32) -> (i32, i32, i32) {
    %c0_i32 = arith.constant 0 : i32
    %c0_i32_0 = arith.constant 0 : i32
    %c0_i32_1 = arith.constant 0 : i32
    return %arg0, %c0_i32, %c0_i32_0 : i32, i32, i32
  }
  func.func @transform_1(%arg0: i32, %arg1: i32) -> (i32, i32) {
    %c0_i32 = arith.constant 0 : i32
    %c0_i32_0 = arith.constant 0 : i32
    return %arg1, %c0_i32 : i32, i32
  }
  func.func @transform_2(%arg0: i32, %arg1: i32) -> (i32, i32, i32) {
    %c0_i32 = arith.constant 0 : i32
    %c0_i32_0 = arith.constant 0 : i32
    %c0_i32_1 = arith.constant 0 : i32
    return %c0_i32, %arg1, %c0_i32_0 : i32, i32, i32
  }
  func.func @transform_3(%arg0: i32, %arg1: i32) -> (i32, i32) {
    %c0_i32 = arith.constant 0 : i32
    %c0_i32_0 = arith.constant 0 : i32
    %c0_i32_1 = arith.constant 0 : i32
    return %c0_i32, %c0_i32_0 : i32, i32
  }
  func.func @transform_4(%arg0: i32, %arg1: i32) -> (i32, i32, i32) {
    %c0_i32 = arith.constant 0 : i32
    %c0_i32_0 = arith.constant 0 : i32
    return %arg0, %arg1, %c0_i32 : i32, i32, i32
  }
}

</mosaic_0001>

<llo_original>
// kernel: tpu_custom_call.1
$region0: #{tpu_custom_call.1}
  #allocation0 [shape = 'u32[]', space=smem, size = 0x4, offset = 0x4, fixed_abs, tag = 'smem constant byte address 0x4 - core index']
  #allocation1 [shape = 'u32[144,128]{1,0:T(1,128)}', space=vmem, size = 0x12000, scoped, tag = 'internal scratch']
  %s0 = inlined_call_operand.vmem [shape: f32[2,4,256], index: 0, kind: input, shape index: {}]
  %s1 = inlined_call_operand.vmem [shape: f32[8,4], index: 1, kind: input, shape index: {}]
  %s2 = inlined_call_operand.vmem [shape: f32[9,8,1], index: 2, kind: input, shape index: {}]
  %s3 = inlined_call_operand.vmem [shape: s32[2,256], index: 3, kind: input, shape index: {}]
  %s4 = inlined_call_operand.hbm [shape: f32[2,8,256], index: 4, kind: output, shape index: {}]
  %s5 = sld [smem:[#allocation0]]
  $region49: #{tpu_custom_call.1} parent=0
    _
  %s7 = ssub.s32 1, %s5
  %s8 = scalar_select 0, %s7, %s5
  $region1: #{tpu_custom_call.1} parent=0
    #allocation2 [shape = 'u8[16384]{0}', space=vmem, size = 0x4000, scoped, tag = 'output window, operand 0']
    #allocation3 [shape = 's32[2]{0}', space=sflag, size = 0x8, scoped, tag = 'scoped memory for tpu_custom_call.1']
    %9 = vsyncpa [#allocation3], 0
    %s10 = scalar_lea.sflag [#allocation3], 1
    %11 = vsyncpa %s10, 0
    loop: start=0, step=1, limit=4
    $region2: #{tpu_custom_call.1} parent=1 // loop_pre_header
      _
    $region3: #{tpu_custom_call.1} parent=1 // loop_header
      %s13 = sphi 0, %s17
      %p14 = scmp.ge.s32.totalorder %s13, 4
      %s20 = sphi 0, %s32
      %s21 = sphi 0, %s28
      %s22 = sphi 0, %s20
      %s23 = sphi 0, %s21
      %s24 = sphi 0, %s22
      %s25 = sphi 0, %s23
      %s35 = sphi 0, %s37
      %s38 = sphi 0, %s35
      %s39 = sphi 0, %s38
      %s55 = sphi 0, %s39
      %s61 = sphi 0, %s63
      %s64 = sphi 0, %s61
      %s65 = sphi 0, %s64
      %s81 = sphi 0, %s65
      %s87 = sphi 0, %s89
      %s90 = sphi 0, %s87
      %s91 = sphi 0, %s90
      %s107 = sphi 0, %s91
      %s111 = sphi 0, %s111
      %s113 = sphi 0, %s111
      %s114 = sphi 0, %s113
      %s128 = sphi 0, %s114
      %s136 = sphi 0, %s138
      %s139 = sphi 0, %s136
      %s140 = sphi 0, %s139
      %s156 = sphi 0, %s140
    $region4: #{tpu_custom_call.1} parent=1 // loop_header_branch
      %16 = sbr.rel (%p14) target = $region8
    $region5: #{tpu_custom_call.1} parent=1 // loop_body
      %s18 = ssub.s32 %s13, 1
      %s19 = ssub.s32 %s13, 2
      %s26 = sadd.s32 1, %s21
      %p27 = scmp.ge.s32.totalorder %s26, 1
      %s28 = scalar_select %p27, 0, %s26
      %s29 = sadd.s32 1, %s20
      %s30 = scalar_select %p27, %s29, %s20
      %p31 = scmp.ge.s32.totalorder %s30, 2
      %s32 = scalar_select %p31, 0, %s30
      %s33 = ssub.s32 %s20, %s32
      %p34 = scmp.eq.s32.totalorder %s33, 0
      %s36 = sadd.s32 %s35, 1
      %s37 = scalar_select %p34, %s35, %s36
      %p40 = pneg %p34
      %p41 = scmp.eq.s32.totalorder %s13, 1
      %p42 = por %p40, %p41
      %p43 = scmp.ne.s32.totalorder %s35, %s38
      %p44 = scmp.eq.s32.totalorder %s13, 0
      %p45 = por %p43, %p44
      %p46 = scmp.ne.s32.totalorder %s35, %s38
      %p47 = scmp.eq.s32.totalorder %s18, 1
      %p48 = por %p46, %p47
      %p49 = scmp.ne.s32.totalorder %s38, %s39
      %p50 = scmp.eq.s32.totalorder %s18, 0
      %p51 = por %p49, %p50
      %p52 = scmp.ne.s32.totalorder %s38, %s39
      %p53 = scmp.eq.s32.totalorder %s19, 1
      %p54 = por %p52, %p53
      %p56 = scmp.ne.s32.totalorder %s39, %s55
      %p57 = scmp.eq.s32.totalorder %s19, 0
      %p58 = por %p56, %p57
      %s59 = ssub.s32 %s21, %s28
      %p60 = scmp.eq.s32.totalorder %s59, 0
      %s62 = sadd.s32 %s61, 1
      %s63 = scalar_select %p60, %s61, %s62
      %p66 = pneg %p60
      %p67 = scmp.eq.s32.totalorder %s13, 1
      %p68 = por %p66, %p67
      %p69 = scmp.ne.s32.totalorder %s61, %s64
      %p70 = scmp.eq.s32.totalorder %s13, 0
      %p71 = por %p69, %p70
      %p72 = scmp.ne.s32.totalorder %s61, %s64
      %p73 = scmp.eq.s32.totalorder %s18, 1
      %p74 = por %p72, %p73
      %p75 = scmp.ne.s32.totalorder %s64, %s65
      %p76 = scmp.eq.s32.totalorder %s18, 0
      %p77 = por %p75, %p76
      %p78 = scmp.ne.s32.totalorder %s64, %s65
      %p79 = scmp.eq.s32.totalorder %s19, 1
      %p80 = por %p78, %p79
      %p82 = scmp.ne.s32.totalorder %s65, %s81
      %p83 = scmp.eq.s32.totalorder %s19, 0
      %p84 = por %p82, %p83
      %s85 = ssub.s32 %s21, %s28
      %p86 = scmp.eq.s32.totalorder %s85, 0
      %s88 = sadd.s32 %s87, 1
      %s89 = scalar_select %p86, %s87, %s88
      %p92 = pneg %p86
      %p93 = scmp.eq.s32.totalorder %s13, 1
      %p94 = por %p92, %p93
      %p95 = scmp.ne.s32.totalorder %s87, %s90
      %p96 = scmp.eq.s32.totalorder %s13, 0
      %p97 = por %p95, %p96
      %p98 = scmp.ne.s32.totalorder %s87, %s90
      %p99 = scmp.eq.s32.totalorder %s18, 1
      %p100 = por %p98, %p99
      %p101 = scmp.ne.s32.totalorder %s90, %s91
      %p102 = scmp.eq.s32.totalorder %s18, 0
      %p103 = por %p101, %p102
      %p104 = scmp.ne.s32.totalorder %s90, %s91
      %p105 = scmp.eq.s32.totalorder %s19, 1
      %p106 = por %p104, %p105
      %p108 = scmp.ne.s32.totalorder %s91, %s107
      %p109 = scmp.eq.s32.totalorder %s19, 0
      %p110 = por %p108, %p109
      %s112 = sadd.s32 %s111, 1
      %p115 = scmp.eq.s32.totalorder %s13, 1
      %p116 = scmp.ne.s32.totalorder %s111, %s113
      %p117 = scmp.eq.s32.totalorder %s13, 0
      %p118 = por %p116, %p117
      %p119 = scmp.ne.s32.totalorder %s111, %s113
      %p120 = scmp.eq.s32.totalorder %s18, 1
      %p121 = por %p119, %p120
      %p122 = scmp.ne.s32.totalorder %s113, %s114
      %p123 = scmp.eq.s32.totalorder %s18, 0
      %p124 = por %p122, %p123
      %p125 = scmp.ne.s32.totalorder %s113, %s114
      %p126 = scmp.eq.s32.totalorder %s19, 1
      %p127 = por %p125, %p126
      %p129 = scmp.ne.s32.totalorder %s114, %s128
      %p130 = scmp.eq.s32.totalorder %s19, 0
      %p131 = por %p129, %p130
      %s132 = ssub.s32 %s20, %s32
      %s133 = ssub.s32 %s21, %s28
      %s134 = sor.u32 %s132, %s133
      %p135 = scmp.eq.s32.totalorder %s134, 0
      %s137 = sadd.s32 %s136, 1
      %s138 = scalar_select %p135, %s136, %s137
      %p141 = pneg %p135
      %p142 = scmp.eq.s32.totalorder %s13, 1
      %p143 = por %p141, %p142
      %p144 = scmp.ne.s32.totalorder %s136, %s139
      %p145 = scmp.eq.s32.totalorder %s13, 0
      %p146 = por %p144, %p145
      %p147 = scmp.ne.s32.totalorder %s136, %s139
      %p148 = scmp.eq.s32.totalorder %s18, 1
      %p149 = por %p147, %p148
      %p150 = scmp.ne.s32.totalorder %s139, %s140
      %p151 = scmp.eq.s32.totalorder %s18, 0
      %p152 = por %p150, %p151
      %p153 = scmp.ne.s32.totalorder %s139, %s140
      %p154 = scmp.eq.s32.totalorder %s19, 1
      %p155 = por %p153, %p154
      %p157 = scmp.ne.s32.totalorder %s140, %s156
      %p158 = scmp.eq.s32.totalorder %s19, 0
      %p159 = por %p157, %p158
      %p160 = scmp.le.s32.totalorder 1, %s13
      %p161 = scmp.lt.s32.totalorder %s13, 3
      %p162 = pnand %p160, %p161
      %p163 = pneg %p162
      // Predicated region
      $region9: #{tpu_custom_call.1} parent=5 // pred_check
        _
      $region10: #{tpu_custom_call.1} parent=5 // pred_check_branch
        %165 = sbr.rel (%p162) target = $region12
      $region11: #{tpu_custom_call.1} parent=5 // pred_region
        %s166 = ssub.s32 %s13, 1
        // Predicated region
        $region13: #{tpu_custom_call.1} parent=11 // pred_check
          %p167 = pneg %p77
        $region14: #{tpu_custom_call.1} parent=11 // pred_check_branch
          %169 = sbr.rel (%p167) target = $region16
        $region15: #{tpu_custom_call.1} parent=11 // pred_region
          %p170 = scmp.lt.s32.totalorder %s23, 0
          %s171 = scalar_select %p170, %s23, 0
          %s172 = smul.addr %s171, 8
          %s173 = scalar_lea.vmem %s1, %s172
        $region16: #{tpu_custom_call.1} parent=11 // pred_fallthru
          _
        // Predicated region
        $region17: #{tpu_custom_call.1} parent=11 // pred_check
          %p174 = pneg %p103
        $region18: #{tpu_custom_call.1} parent=11 // pred_check_branch
          %176 = sbr.rel (%p174) target = $region20
        $region19: #{tpu_custom_call.1} parent=11 // pred_region
          %p177 = scmp.lt.s32.totalorder %s23, 0
          %s178 = scalar_select %p177, %s23, 0
          %s179 = smul.addr %s178, 8
          %s180 = scalar_lea.vmem %s2, %s179
        $region20: #{tpu_custom_call.1} parent=11 // pred_fallthru
          _
        // Predicated region
        $region21: #{tpu_custom_call.1} parent=11 // pred_check
          %p181 = pneg %p124
        $region22: #{tpu_custom_call.1} parent=11 // pred_check_branch
          %183 = sbr.rel (%p181) target = $region24
        $region23: #{tpu_custom_call.1} parent=11 // pred_region
          _
        $region24: #{tpu_custom_call.1} parent=11 // pred_fallthru
          _
      $region12: #{tpu_custom_call.1} parent=5 // pred_fallthru
        _
      %p184 = scmp.lt.s32.totalorder %s13, 2
      // Predicated region
      $region25: #{tpu_custom_call.1} parent=5 // pred_check
        %p185 = pneg %p184
      $region26: #{tpu_custom_call.1} parent=5 // pred_check_branch
        %187 = sbr.rel (%p185) target = $region28
      $region27: #{tpu_custom_call.1} parent=5 // pred_region
        // Predicated region
        $region29: #{tpu_custom_call.1} parent=27 // pred_check
          %p188 = pneg %p45
        $region30: #{tpu_custom_call.1} parent=27 // pred_check_branch
          %190 = sbr.rel (%p188) target = $region32
        $region31: #{tpu_custom_call.1} parent=27 // pred_region
          %p191 = scmp.lt.s32.totalorder %s20, 1
          %s192 = scalar_select %p191, %s20, 1
          %s193 = smul.addr %s192, 2
          %s194 = smul.addr %s193, 4
          %s195 = scalar_lea.vmem %s0, %s194
        $region32: #{tpu_custom_call.1} parent=27 // pred_fallthru
          _
      $region28: #{tpu_custom_call.1} parent=5 // pred_fallthru
        _
      %p196 = scmp.le.s32.totalorder 1, %s13
      %p197 = scmp.lt.s32.totalorder %s13, 3
      %p198 = pnand %p196, %p197
      %p199 = pneg %p198
      // Predicated region
      $region33: #{tpu_custom_call.1} parent=5 // pred_check
        _
      $region34: #{tpu_custom_call.1} parent=5 // pred_check_branch
        %201 = sbr.rel (%p198) target = $region36
      $region35: #{tpu_custom_call.1} parent=5 // pred_region
        %s202 = ssub.s32 %s13, 1
        %p203 = scmp.lt.s32.totalorder %s22, 1
        %s204 = scalar_select %p203, %s22, 1
        %s205 = smul.addr %s204, 2
        %s206 = smul.addr %s205, 4
        %s207 = scalar_lea.vmem %s0, %s206
        %p208 = pneg %p51
        %p209 = pneg %p48
        %p210 = scmp.lt.s32.totalorder %s23, 0
        %s211 = scalar_select %p210, %s23, 0
        %s212 = smul.addr %s211, 8
        %s213 = scalar_lea.vmem %s1, %s212
        %p214 = pneg %p77
        %p215 = pneg %p74
        %p216 = scmp.lt.s32.totalorder %s23, 0
        %s217 = scalar_select %p216, %s23, 0
        %s218 = smul.addr %s217, 8
        %s219 = scalar_lea.vmem %s2, %s218
        %p220 = pneg %p103
        %p221 = pneg %p100
        %p222 = pneg %p124
        %p223 = pneg %p121
        %p224 = pneg %p152
        %p225 = pneg %p149
        %s226 = sand.u32 %s139, 1
        %s227 = scalar_lea.sflag [#allocation3], %s226
        %s228 = sand.u32 %s139, 1
        %s229 = smul.addr %s228, 16
        %s230 = scalar_lea.vmem [#allocation2], %s229
        %p231 = scmp.lt.s32.totalorder %s22, 1
        %s232 = scalar_select %p231, %s22, 1
        %s233 = smul.addr %s232, 2
        %s234 = smul.addr %s233, 4
        %s235 = scalar_lea.vmem %s0, %s234
        %p236 = scmp.lt.s32.totalorder %s23, 0
        %s237 = scalar_select %p236, %s23, 0
        %s238 = smul.addr %s237, 8
        %s239 = scalar_lea.vmem %s1, %s238
        %p240 = scmp.lt.s32.totalorder %s23, 0
        %s241 = scalar_select %p240, %s23, 0
        %s242 = smul.addr %s241, 8
        %s243 = scalar_lea.vmem %s2, %s242
        %v244 = vld [vmem:[%s239] sm:$0xff]
        %v245 = vld [vmem:[%s235] sm:$0xff]
        %v247 = vcombine.high %v245, %v245
        %vm248 = vcmask 31744
        %v250 = vsel %vm248, %v244, 0
        %vm252 = vcmask 1043456
        %v253 = vsel %vm252, %v245, 0
        %v255 = vsel %vm252, %v247, 0
        %257 = vmatprep.subr.mxu0 0.0
        %258 = vmatpush1.msra.mxu0 0.0
        %259 = vmatprep.subr.mxu0 0.0
        %260 = vmatpush1.msra.mxu0 0.0
        %261 = vmatprep.subr.mxu0 0.0
        %262 = vmatpush1.msra.mxu0 0.0
        %263 = vmatprep.subr.mxu0 0.0
        %264 = vmatpush1.msra.mxu0 0.0
        %265 = vmatprep.subr.mxu0 0.0
        %266 = vmatpush1.msra.mxu0 0.0
        %267 = vmatprep.subr.mxu0 0.0
        %268 = vmatpush1.msra.mxu0 0.0
        %269 = vmatprep.subr.mxu0 0.0
        %270 = vmatpush1.msra.mxu0 0.0
        %271 = vmatprep.subr.mxu0 0.0
        %272 = vmatpush1.msra.mxu0 0.0
        %273 = vmatprep.subr.mxu0 0.0
        %274 = vmatpush1.msra.mxu0 0.0
        %275 = vmatprep.subr.mxu0 0.0
        %276 = vmatpush1.msra.mxu0 0.0
        %277 = vmatprep.subr.mxu0 0.0
        %278 = vmatpush1.msra.mxu0 0.0
        %279 = vmatprep.subr.mxu0 0.0
        %280 = vmatpush1.msra.mxu0 0.0
        %281 = vmatprep.subr.mxu0 0.0
        %282 = vmatpush1.msra.mxu0 0.0
        %283 = vmatprep.subr.mxu0 0.0
        %284 = vmatpush1.msra.mxu0 0.0
        %285 = vmatprep.subr.mxu0 0.0
        %286 = vmatpush1.msra.mxu0 0.0
        %287 = vmatprep.subr.mxu0 %v255
        %288 = vmatpush1.msra.mxu0 %v253
        %289 = vmatprep.subr.mxu0 0.0
        %290 = vmatpush2.msra.mxu0 0.0
        %291 = vmatprep.subr.mxu0 0.0
        %292 = vmatpush2.msra.mxu0 0.0
        %293 = vmatprep.subr.mxu0 0.0
        %294 = vmatpush2.msra.mxu0 0.0
        %295 = vmatprep.subr.mxu0 0.0
        %296 = vmatpush2.msra.mxu0 0.0
        %297 = vmatprep.subr.mxu0 0.0
        %298 = vmatpush2.msra.mxu0 0.0
        %299 = vmatprep.subr.mxu0 0.0
        %300 = vmatpush2.msra.mxu0 0.0
        %301 = vmatprep.subr.mxu0 0.0
        %302 = vmatpush2.msra.mxu0 0.0
        %303 = vmatprep.subr.mxu0 0.0
        %304 = vmatpush2.msra.mxu0 0.0
        %305 = vmatprep.subr.mxu0 0.0
        %306 = vmatpush2.msra.mxu0 0.0
        %307 = vmatprep.subr.mxu0 0.0
        %308 = vmatpush2.msra.mxu0 0.0
        %309 = vmatprep.subr.mxu0 0.0
        %310 = vmatpush2.msra.mxu0 0.0
        %311 = vmatprep.subr.mxu0 0.0
        %312 = vmatpush2.msra.mxu0 0.0
        %313 = vmatprep.subr.mxu0 0.0
        %314 = vmatpush2.msra.mxu0 0.0
        %315 = vmatprep.subr.mxu0 0.0
        %316 = vmatpush2.msra.mxu0 0.0
        %317 = vmatprep.subr.mxu0 0.0
        %318 = vmatpush2.msra.mxu0 0.0
        %319 = vmatprep.subr.mxu0 0.0
        %320 = vmatpush2.msra.mxu0 0.0
        %321 = vmatprep.mubr.f32.mxu0 0.0
        %322 = vmatmul.mubr.f32.gmra.mxu0 %v250
        %v323 = vpop.f32.mrf.mxu0
        %v324 = vadd.f32 0.0, %v323
        %v325 = vpop.f32.mrf.mxu0
        %v326 = vadd.f32 0.0, %v325
        %327 = vdwg.mxu0
        %v328 = vld [vmem:[%s3] ss:$2 sm:$0x3]
        %s329 = scalar_lea.vmem %s3, 1
        %v330 = vld [vmem:[%s329] ss:$2 sm:$0x3]
        %331 = vrot.lane.b32.xlu0 %v324, 17
        %v332 = vpop.permute.xlu0 %331
        %333 = vrot.lane.b32.xlu0 %v326, 17
        %v334 = vpop.permute.xlu0 %333
        %v335 = vlaneseq
        %v336 = vand.u32 %v335, 127
        %vm337 = vcmp.lt.s32.totalorder %v336, 17
        %v338 = vsel %vm337, %v332, %v334
        %v339 = vsel %vm337, %v334, %v332
        %vm340 = vcmp.ge.s32.totalorder %v328, 1
        %vm341 = vcmp.ge.s32.totalorder %v330, 1
        %vm342 = vmand %vm340, %vm341
        %v343 = vsel %vm342, 1, 0
        %v344 = vlaneseq
        %v345 = vshrl.u32 %v344, 7
        %v346 = vsub.s32 0, %v345
        %v347 = vrot.slane %v343, %v346
        %v348 = vlaneseq
        %v349 = vshrl.u32 %v348, 7
        %v350 = vsub.s32 1, %v349
        %v351 = vrot.slane %v343, %v350
        %vm352 = vcmp.eq.s32.totalorder %v347, 1
        %vm353 = vcmp.eq.s32.totalorder %v351, 1
        %v354 = vsel %vm352, %v339, 0.0
        %v355 = vsel %vm353, %v338, 0.0
        %v356 = vld [vmem:[%s243] sm:$0xff]
        %358 = vset.pattern.permute.xlu0 0
        %359 = vperm.xlu0 %358, %v356
        %v360 = vpop.permute.xlu0 %359
        %v362 = vmul.f32 %v354, %v360
        %v363 = vmul.f32 %v355, %v360
        %v364 = vadd.f32 %v362, 0.0
        %v365 = vadd.f32 %v363, 0.0
        %366 = vrot.lane.b32.xlu0 %v324, 16
        %v367 = vpop.permute.xlu0 %366
        %368 = vrot.lane.b32.xlu0 %v326, 16
        %v369 = vpop.permute.xlu0 %368
        %vm370 = vcmp.lt.s32.totalorder %v336, 16
        %v371 = vsel %vm370, %v367, %v369
        %v372 = vsel %vm370, %v369, %v367
        %v373 = vsel %vm340, 1, 0
        %v374 = vlaneseq
        %v375 = vshrl.u32 %v374, 7
        %v376 = vsub.s32 0, %v375
        %v377 = vrot.slane %v373, %v376
        %v378 = vlaneseq
        %v379 = vshrl.u32 %v378, 7
        %v380 = vsub.s32 1, %v379
        %v381 = vrot.slane %v373, %v380
        %vm382 = vcmp.eq.s32.totalorder %v377, 1
        %vm383 = vcmp.eq.s32.totalorder %v381, 1
        %v384 = vsel %vm382, %v372, 0.0
        %v385 = vsel %vm383, %v371, 0.0
        %s386 = scalar_lea.vmem %s243, 8
        %v387 = vld [vmem:[%s386] sm:$0xff]
        %389 = vset.pattern.permute.xlu0 0
        %390 = vperm.xlu0 %389, %v387
        %v391 = vpop.permute.xlu0 %390
        %v393 = vmul.f32 %v384, %v391
        %v394 = vmul.f32 %v385, %v391
        %v395 = vadd.f32 %v364, %v393
        %v396 = vadd.f32 %v365, %v394
        %397 = vrot.lane.b32.xlu0 %v324, 15
        %v398 = vpop.permute.xlu0 %397
        %399 = vrot.lane.b32.xlu0 %v326, 15
        %v400 = vpop.permute.xlu0 %399
        %vm401 = vcmp.lt.s32.totalorder %v336, 15
        %v402 = vsel %vm401, %v398, %v400
        %v403 = vsel %vm401, %v400, %v398
        %vm404 = vcmp.lt.s32.totalorder %v330, 15
        %vm405 = vmand %vm340, %vm404
        %v406 = vsel %vm405, 1, 0
        %v407 = vlaneseq
        %v408 = vshrl.u32 %v407, 7
        %v409 = vsub.s32 0, %v408
        %v410 = vrot.slane %v406, %v409
        %v411 = vlaneseq
        %v412 = vshrl.u32 %v411, 7
        %v413 = vsub.s32 1, %v412
        %v414 = vrot.slane %v406, %v413
        %vm415 = vcmp.eq.s32.totalorder %v410, 1
        %vm416 = vcmp.eq.s32.totalorder %v414, 1
        %v417 = vsel %vm415, %v403, 0.0
        %v418 = vsel %vm416, %v402, 0.0
        %s419 = scalar_lea.vmem %s243, 16
        %v420 = vld [vmem:[%s419] sm:$0xff]
        %422 = vset.pattern.permute.xlu0 0
        %423 = vperm.xlu0 %422, %v420
        %v424 = vpop.permute.xlu0 %423
        %v426 = vmul.f32 %v417, %v424
        %v427 = vmul.f32 %v418, %v424
        %v428 = vadd.f32 %v395, %v426
        %v429 = vadd.f32 %v396, %v427
        %430 = vrot.lane.b32.xlu0 %v324, 1
        %v431 = vpop.permute.xlu0 %430
        %432 = vrot.lane.b32.xlu0 %v326, 1
        %v433 = vpop.permute.xlu0 %432
        %vm434 = vcmp.lt.s32.totalorder %v336, 1
        %v435 = vsel %vm434, %v431, %v433
        %v436 = vsel %vm434, %v433, %v431
        %v437 = vsel %vm341, 1, 0
        %v438 = vlaneseq
        %v439 = vshrl.u32 %v438, 7
        %v440 = vsub.s32 0, %v439
        %v441 = vrot.slane %v437, %v440
        %v442 = vlaneseq
        %v443 = vshrl.u32 %v442, 7
        %v444 = vsub.s32 1, %v443
        %v445 = vrot.slane %v437, %v444
        %vm446 = vcmp.eq.s32.totalorder %v441, 1
        %vm447 = vcmp.eq.s32.totalorder %v445, 1
        %v448 = vsel %vm446, %v436, 0.0
        %v449 = vsel %vm447, %v435, 0.0
        %s450 = scalar_lea.vmem %s243, 24
        %v451 = vld [vmem:[%s450] sm:$0xff]
        %453 = vset.pattern.permute.xlu0 0
        %454 = vperm.xlu0 %453, %v451
        %v455 = vpop.permute.xlu0 %454
        %v457 = vmul.f32 %v448, %v455
        %v458 = vmul.f32 %v449, %v455
        %v459 = vadd.f32 %v428, %v457
        %v460 = vadd.f32 %v429, %v458
        %s461 = scalar_lea.vmem %s243, 32
        %v462 = vld [vmem:[%s461] sm:$0xff]
        %464 = vset.pattern.permute.xlu0 0
        %465 = vperm.xlu0 %464, %v462
        %v466 = vpop.permute.xlu0 %465
        %v468 = vmul.f32 %v324, %v466
        %v469 = vmul.f32 %v326, %v466
        %v470 = vadd.f32 %v459, %v468
        %v471 = vadd.f32 %v460, %v469
        %472 = vrot.lane.b32.xlu0 %v324, 127
        %v473 = vpop.permute.xlu0 %472
        %474 = vrot.lane.b32.xlu0 %v326, 127
        %v475 = vpop.permute.xlu0 %474
        %vm476 = vcmp.lt.s32.totalorder %v336, 127
        %v477 = vsel %vm476, %v473, %v475
        %v478 = vsel %vm476, %v475, %v473
        %v479 = vsel %vm404, 1, 0
        %v480 = vlaneseq
        %v481 = vshrl.u32 %v480, 7
        %v482 = vsub.s32 0, %v481
        %v483 = vrot.slane %v479, %v482
        %v484 = vlaneseq
        %v485 = vshrl.u32 %v484, 7
        %v486 = vsub.s32 1, %v485
        %v487 = vrot.slane %v479, %v486
        %vm488 = vcmp.eq.s32.totalorder %v483, 1
        %vm489 = vcmp.eq.s32.totalorder %v487, 1
        %v490 = vsel %vm488, %v477, 0.0
        %v491 = vsel %vm489, %v478, 0.0
        %s492 = scalar_lea.vmem %s243, 40
        %v493 = vld [vmem:[%s492] sm:$0xff]
        %495 = vset.pattern.permute.xlu0 0
        %496 = vperm.xlu0 %495, %v493
        %v497 = vpop.permute.xlu0 %496
        %v499 = vmul.f32 %v490, %v497
        %v500 = vmul.f32 %v491, %v497
        %v501 = vadd.f32 %v470, %v499
        %v502 = vadd.f32 %v471, %v500
        %503 = vrot.lane.b32.xlu0 %v324, 113
        %v504 = vpop.permute.xlu0 %503
        %505 = vrot.lane.b32.xlu0 %v326, 113
        %v506 = vpop.permute.xlu0 %505
        %vm507 = vcmp.lt.s32.totalorder %v336, 113
        %v508 = vsel %vm507, %v504, %v506
        %v509 = vsel %vm507, %v506, %v504
        %vm510 = vcmp.lt.s32.totalorder %v328, 15
        %vm511 = vmand %vm510, %vm341
        %v512 = vsel %vm511, 1, 0
        %v513 = vlaneseq
        %v514 = vshrl.u32 %v513, 7
        %v515 = vsub.s32 0, %v514
        %v516 = vrot.slane %v512, %v515
        %v517 = vlaneseq
        %v518 = vshrl.u32 %v517, 7
        %v519 = vsub.s32 1, %v518
        %v520 = vrot.slane %v512, %v519
        %vm521 = vcmp.eq.s32.totalorder %v516, 1
        %vm522 = vcmp.eq.s32.totalorder %v520, 1
        %v523 = vsel %vm521, %v508, 0.0
        %v524 = vsel %vm522, %v509, 0.0
        %s525 = scalar_lea.vmem %s243, 48
        %v526 = vld [vmem:[%s525] sm:$0xff]
        %528 = vset.pattern.permute.xlu0 0
        %529 = vperm.xlu0 %528, %v526
        %v530 = vpop.permute.xlu0 %529
        %v532 = vmul.f32 %v523, %v530
        %v533 = vmul.f32 %v524, %v530
        %v534 = vadd.f32 %v501, %v532
        %v535 = vadd.f32 %v502, %v533
        %536 = vrot.lane.b32.xlu0 %v324, 112
        %v537 = vpop.permute.xlu0 %536
        %538 = vrot.lane.b32.xlu0 %v326, 112
        %v539 = vpop.permute.xlu0 %538
        %vm540 = vcmp.lt.s32.totalorder %v336, 112
        %v541 = vsel %vm540, %v537, %v539
        %v542 = vsel %vm540, %v539, %v537
        %v543 = vsel %vm510, 1, 0
        %v544 = vlaneseq
        %v545 = vshrl.u32 %v544, 7
        %v546 = vsub.s32 0, %v545
        %v547 = vrot.slane %v543, %v546
        %v548 = vlaneseq
        %v549 = vshrl.u32 %v548, 7
        %v550 = vsub.s32 1, %v549
        %v551 = vrot.slane %v543, %v550
        %vm552 = vcmp.eq.s32.totalorder %v547, 1
        %vm553 = vcmp.eq.s32.totalorder %v551, 1
        %v554 = vsel %vm552, %v541, 0.0
        %v555 = vsel %vm553, %v542, 0.0
        %s556 = scalar_lea.vmem %s243, 56
        %v557 = vld [vmem:[%s556] sm:$0xff]
        %559 = vset.pattern.permute.xlu0 0
        %560 = vperm.xlu0 %559, %v557
        %v561 = vpop.permute.xlu0 %560
        %v563 = vmul.f32 %v554, %v561
        %v564 = vmul.f32 %v555, %v561
        %v565 = vadd.f32 %v534, %v563
        %v566 = vadd.f32 %v535, %v564
        %567 = vrot.lane.b32.xlu0 %v324, 111
        %v568 = vpop.permute.xlu0 %567
        %569 = vrot.lane.b32.xlu0 %v326, 111
        %v570 = vpop.permute.xlu0 %569
        %vm571 = vcmp.lt.s32.totalorder %v336, 111
        %v572 = vsel %vm571, %v568, %v570
        %v573 = vsel %vm571, %v570, %v568
        %vm574 = vmand %vm510, %vm404
        %v575 = vsel %vm574, 1, 0
        %v576 = vlaneseq
        %v577 = vshrl.u32 %v576, 7
        %v578 = vsub.s32 0, %v577
        %v579 = vrot.slane %v575, %v578
        %v580 = vlaneseq
        %v581 = vshrl.u32 %v580, 7
        %v582 = vsub.s32 1, %v581
        %v583 = vrot.slane %v575, %v582
        %vm584 = vcmp.eq.s32.totalorder %v579, 1
        %vm585 = vcmp.eq.s32.totalorder %v583, 1
        %v586 = vsel %vm584, %v572, 0.0
        %v587 = vsel %vm585, %v573, 0.0
        %s588 = scalar_lea.vmem %s243, 64
        %v589 = vld [vmem:[%s588] sm:$0xff]
        %591 = vset.pattern.permute.xlu0 0
        %592 = vperm.xlu0 %591, %v589
        %v593 = vpop.permute.xlu0 %592
        %v595 = vmul.f32 %v586, %v593
        %v596 = vmul.f32 %v587, %v593
        %v597 = vadd.f32 %v565, %v595
        %v598 = vadd.f32 %v566, %v596
        %599 = vst [vmem:[%s230] sm:$0xff] %v597
        %600 = vst [vmem:[%s230 + $0x8] sm:$0xff] %v598
        %s601 = sand.u32 %s139, 1
        %s602 = scalar_lea.sflag [#allocation3], %s601
        %s603 = sand.u32 %s139, 1
        %s604 = smul.addr %s603, 16
        %s605 = scalar_lea.vmem [#allocation2], %s604
        // Predicated region
        $region37: #{tpu_custom_call.1} parent=35 // pred_check
          %p606 = pneg %p149
        $region38: #{tpu_custom_call.1} parent=35 // pred_check_branch
          %608 = sbr.rel (%p606) target = $region40
        $region39: #{tpu_custom_call.1} parent=35 // pred_region
          %s610 = ssub.s32 256, 256
          %611 = vsyncadd %s602, %s610
          %s612 = smul.addr %s23, 2
          %s613 = smul.addr %s22, 2
          %s614 = sadd.s32 %s612, %s613
          %s615 = smul.addr %s614, 128
          %s616 = scalar_lea.hbm %s4, %s615
          %s618 = sshll.u32 %s605, 4
          %s619 = int_to_ptr.vmem [resolvable:$true] %s618
          %621 = dma.vmem_to_hbm [thread:$0]  %s619, 256, %s616, %s602
        $region40: #{tpu_custom_call.1} parent=35 // pred_fallthru
          _
      $region36: #{tpu_custom_call.1} parent=5 // pred_fallthru
        _
      %p622 = scmp.le.s32.totalorder 2, %s13
      // Predicated region
      $region41: #{tpu_custom_call.1} parent=5 // pred_check
        %p623 = pneg %p622
      $region42: #{tpu_custom_call.1} parent=5 // pred_check_branch
        %625 = sbr.rel (%p623) target = $region44
      $region43: #{tpu_custom_call.1} parent=5 // pred_region
        %s626 = ssub.s32 %s13, 2
        // Predicated region
        $region45: #{tpu_custom_call.1} parent=43 // pred_check
          %p627 = pneg %p155
        $region46: #{tpu_custom_call.1} parent=43 // pred_check_branch
          %629 = sbr.rel (%p627) target = $region48
        $region47: #{tpu_custom_call.1} parent=43 // pred_region
          %s630 = sand.u32 %s140, 1
          %s631 = scalar_lea.sflag [#allocation3], %s630
          %s632 = sand.u32 %s140, 1
          %s633 = smul.addr %s632, 16
          %s634 = scalar_lea.vmem [#allocation2], %s633
          %635 = dma.done %s631, 256
        $region48: #{tpu_custom_call.1} parent=43 // pred_fallthru
          _
      $region44: #{tpu_custom_call.1} parent=5 // pred_fallthru
        _
    $region6: #{tpu_custom_call.1} parent=1 // loop_footer
      %s17 = sadd.s32 1, %s13
    $region7: #{tpu_custom_call.1} parent=1 // loop_footer_branch
      %12 = sbr.rel target = $region3
    $region8: #{tpu_custom_call.1} parent=1 // loop_exit
      _
    %636 = vsyncpa [#allocation3], 1
    %s637 = scalar_lea.sflag [#allocation3], 1
    %638 = vsyncpa %s637, 1

</llo_original>
